<compile_context>
chip_gen: v5e
topology: v5e:2x2
jax: 0.10.0
libtpu: 0.0.40
codegen_flags: <defaults>
</compile_context>

<pallas_src>
import jax
import jax.numpy as jnp
from jax.experimental import pallas as pl
from jax.experimental.pallas import tpu as pltpu

_LANE = 128
_SUBLANE = 8


def _round_up(n, m):
    return ((n + m - 1) // m) * m


def _fnn_kernel(x_ref, w1_ref, b1_ref, w2_ref, b2_ref, w3_ref, b3_ref, o_ref):
    # One batch tile per grid step; weights/biases are VMEM-resident
    # (constant index_maps -> DMA'd once, reused across the whole grid).
    x = x_ref[...]                                                      # [TB, 10]

    # fc1 + ReLU   (f32 accumulate on MXU, f32 epilogue on VPU)
    h1 = jnp.dot(x, w1_ref[...], preferred_element_type=jnp.float32)   # [TB, h1p]
    h1 = jnp.maximum(h1 + b1_ref[...], 0.0)

    # dropout -> identity (eval mode)

    # fc2 + ReLU
    h2 = jnp.dot(h1, w2_ref[...], preferred_element_type=jnp.float32)  # [TB, h2p]
    h2 = jnp.maximum(h2 + b2_ref[...], 0.0)

    # dropout -> identity (eval mode)

    # fc3 (no activation); narrow (TB, 3) store — full last dim, no padding.
    out = jnp.dot(h2, w3_ref[...], preferred_element_type=jnp.float32)  # [TB, 3]
    o_ref[...] = (out + b3_ref[...]).astype(o_ref.dtype)


def prepare_params(params):
    """One-time parameter prep (call once; reuse the result every forward).

    Pads the hidden widths to multiples of 128 lanes (zeros are exact through
    the bias + ReLU chain) and keeps the 3-wide output UNpadded so the HBM
    writeback stays minimal.  Weights stored [in, out]; biases [1, out].
    """
    w1, b1, w2, b2, w3, b3 = (
        params["w1"], params["b1"], params["w2"],
        params["b2"], params["w3"], params["b3"],
    )
    f32 = jnp.float32
    F, h1 = w1.shape
    h2 = w2.shape[1]
    out_dim = w3.shape[1]

    h1p = _round_up(h1, _LANE)
    h2p = _round_up(h2, _LANE)

    w1p = jnp.zeros((F, h1p), f32).at[:, :h1].set(w1.astype(f32))
    b1p = jnp.zeros((1, h1p), f32).at[:, :h1].set(b1.reshape(1, -1).astype(f32))
    w2p = jnp.zeros((h1p, h2p), f32).at[:h1, :h2].set(w2.astype(f32))
    b2p = jnp.zeros((1, h2p), f32).at[:, :h2].set(b2.reshape(1, -1).astype(f32))
    w3p = jnp.zeros((h2p, out_dim), f32).at[:h2, :].set(w3.astype(f32))
    b3p = b3.reshape(1, -1).astype(f32)

    return tuple(jax.device_put(a) for a in (w1p, b1p, w2p, b2p, w3p, b3p))


def fnn_forward(x, prepared_params, *, batch_tile=2048):
    """x: [B, 10] float32; prepared_params: output of prepare_params()."""
    w1p, b1p, w2p, b2p, w3p, b3p = prepared_params
    B, F = x.shape
    assert F == w1p.shape[0]
    h1p = w1p.shape[1]
    h2p = w2p.shape[1]
    out_dim = w3p.shape[1]
    f32 = jnp.float32

    # --- batch tiling: big tile amortizes the ~0.35 us per-grid-step cost.
    #     Tile is a multiple of 8 (sublane); for large batches it is a
    #     multiple of 256 (good MXU height on v6e/v7x, and fine for v5e's
    #     128-wide MXU).
    B_r8 = _round_up(B, _SUBLANE)
    TB = min(batch_tile, B_r8)
    # v7x has 2 TensorCores: if one tile would cover the whole batch and the
    # batch is big enough to split, use (at least) two grid steps so the
    # "parallel" axis can feed both cores.  v5e/v6e are single-TC; the extra
    # step costs ~0.35 us, negligible.
    if TB >= B_r8 and B_r8 >= 2 * _SUBLANE:
        TB = _round_up(-(-B_r8 // 2), _SUBLANE)
    B_pad = _round_up(B_r8, TB)

    if B_pad != B:
        x_p = jnp.zeros((B_pad, F), f32).at[:B, :].set(x.astype(f32))
    else:
        x_p = x.astype(f32)

    grid = (B_pad // TB,)

    # --- VMEM budget using lane-padded footprints (Mosaic lays each block out
    #     in (8, 128) tiles, so the (TB, 10) x block occupies TB x 128 lanes).
    x_tile_vmem = 4 * TB * _round_up(F, _LANE)
    out_tile_vmem = 4 * TB * _round_up(out_dim, _LANE)
    interm_vmem = 4 * TB * (h1p + h2p)
    weight_vmem = 4 * (
        _round_up(F, _SUBLANE) * h1p + _LANE
        + h1p * h2p + _LANE
        + h2p * _round_up(out_dim, _LANE) + _LANE
    )
    vmem_limit = (2 * (x_tile_vmem + out_tile_vmem)      # double-buffered streams
                  + interm_vmem + 2 * weight_vmem + (4 << 20))
    vmem_limit = min(int(vmem_limit), 48 * 1024 * 1024)

    # --- advisory cost estimate (lets XLA overlap this short call).
    flops = 2 * B_pad * (F * h1p + h1p * h2p + h2p * out_dim)
    bytes_accessed = 4 * (
        B_pad * F + B_pad * out_dim
        + F * h1p + h1p + h1p * h2p + h2p + h2p * out_dim + out_dim
    )

    out = pl.pallas_call(
        _fnn_kernel,
        out_shape=jax.ShapeDtypeStruct((B_pad, out_dim), f32),
        grid=grid,
        in_specs=[
            pl.BlockSpec((TB, F), lambda i: (i, 0)),            # x: streamed
            pl.BlockSpec((F, h1p), lambda i: (0, 0)),           # w1: resident
            pl.BlockSpec((1, h1p), lambda i: (0, 0)),           # b1: resident
            pl.BlockSpec((h1p, h2p), lambda i: (0, 0)),         # w2: resident
            pl.BlockSpec((1, h2p), lambda i: (0, 0)),           # b2: resident
            pl.BlockSpec((h2p, out_dim), lambda i: (0, 0)),     # w3: resident
            pl.BlockSpec((1, out_dim), lambda i: (0, 0)),       # b3: resident
        ],
        out_specs=pl.BlockSpec((TB, out_dim), lambda i: (i, 0)),  # narrow, unpadded
        compiler_params=pltpu.CompilerParams(
            dimension_semantics=("parallel",),
            vmem_limit_bytes=vmem_limit,
        ),
        cost_estimate=pl.CostEstimate(
            flops=flops, transcendentals=0, bytes_accessed=bytes_accessed),
    )(x_p, w1p, b1p, w2p, b2p, w3p, b3p)

    if B_pad != B:
        out = out[:B]
    return out


def init_params(key, hidden1, hidden2):
    """Deterministic init matching the PyTorch module's shapes.

    fc1: Linear(10, hidden1); fc2: Linear(hidden1, hidden2); fc3: Linear(hidden2, 3).
    Stored transposed ([in, out]) for the x @ W convention; biases [1, out].
    """
    k1, k2, k3, k4, k5, k6 = jax.random.split(key, 6)

    def uniform_like_torch(k, fan_in, shape):
        bound = 1.0 / jnp.sqrt(jnp.float32(fan_in))
        return jax.random.uniform(k, shape, jnp.float32, -bound, bound)

    return {
        "w1": uniform_like_torch(k1, 10, (10, hidden1)),
        "b1": uniform_like_torch(k2, 10, (1, hidden1)),
        "w2": uniform_like_torch(k3, hidden1, (hidden1, hidden2)),
        "b2": uniform_like_torch(k4, hidden1, (1, hidden2)),
        "w3": uniform_like_torch(k5, hidden2, (hidden2, 3)),
        "b3": uniform_like_torch(k6, hidden2, (1, 3)),
    }


if __name__ == "__main__":
    key = jax.random.PRNGKey(0)
    k_params, k_x = jax.random.split(key)

    hidden1, hidden2 = 32, 16
    batch = 8

    params = init_params(k_params, hidden1, hidden2)
    prepared = prepare_params(params)          # one-time padding, out of hot path
    x = jax.random.normal(k_x, (batch, 10), dtype=jnp.float32)

    out = fnn_forward(x, prepared)
    out = jax.block_until_ready(out)

    # Sanity check against a plain-JAX reference of the same forward pass.
    ref = jnp.maximum(x @ params["w1"] + params["b1"], 0.0)
    ref = jnp.maximum(ref @ params["w2"] + params["b2"], 0.0)
    ref = ref @ params["w3"] + params["b3"]
    assert out.shape == (batch, 3)
    assert jnp.allclose(out, ref, atol=1e-5, rtol=1e-5)

    print("KERNEL_OK")
</pallas_src>

<mosaic_0001>
module attributes {stable_mosaic.version = 11 : i64} {
  func.func @_fnn_kernel(%arg0: i32, %arg1: memref<8x10xf32, #tpu.memory_space<vmem>>, %arg2: memref<10x128xf32, #tpu.memory_space<vmem>>, %arg3: memref<1x128xf32, #tpu.memory_space<vmem>>, %arg4: memref<128x128xf32, #tpu.memory_space<vmem>>, %arg5: memref<1x128xf32, #tpu.memory_space<vmem>>, %arg6: memref<128x3xf32, #tpu.memory_space<vmem>>, %arg7: memref<1x3xf32, #tpu.memory_space<vmem>>, %arg8: memref<8x3xf32, #tpu.memory_space<vmem>>) attributes {dimension_semantics = [#tpu.dimension_semantics<parallel>], iteration_bounds = array<i64: 1>, scalar_prefetch = 0 : i64, scratch_operands = 0 : i64, tpu.core_type = #tpu.core_type<tc>, window_params = [{transform_indices = @transform_0, window_bounds = array<i64: 8, 10>}, {pipeline_mode = #tpu.pipeline_mode<synchronous>, transform_indices = @transform_1, window_bounds = array<i64: 10, 128>}, {pipeline_mode = #tpu.pipeline_mode<synchronous>, transform_indices = @transform_2, window_bounds = array<i64: 1, 128>}, {pipeline_mode = #tpu.pipeline_mode<synchronous>, transform_indices = @transform_3, window_bounds = array<i64: 128, 128>}, {pipeline_mode = #tpu.pipeline_mode<synchronous>, transform_indices = @transform_4, window_bounds = array<i64: 1, 128>}, {pipeline_mode = #tpu.pipeline_mode<synchronous>, transform_indices = @transform_5, window_bounds = array<i64: 128, 3>}, {pipeline_mode = #tpu.pipeline_mode<synchronous>, transform_indices = @transform_6, window_bounds = array<i64: 1, 3>}, {transform_indices = @transform_7, window_bounds = array<i64: 8, 3>}]} {
    %c0 = arith.constant 0 : index
    %c0_0 = arith.constant 0 : index
    %0 = vector.load %arg1[%c0, %c0_0] : memref<8x10xf32, #tpu.memory_space<vmem>>, vector<8x10xf32>
    %c0_1 = arith.constant 0 : index
    %c0_2 = arith.constant 0 : index
    %1 = vector.load %arg2[%c0_1, %c0_2] : memref<10x128xf32, #tpu.memory_space<vmem>>, vector<10x128xf32>
    %cst = arith.constant dense<0.000000e+00> : vector<8x128xf32>
    %2 = tpu.matmul %0, %1, %cst {dimension_numbers = #tpu.dot_dimension_numbers<[1], [0], [0], [1], [0, 0, 1, 1], [], []>} : vector<8x10xf32>, vector<10x128xf32>, vector<8x128xf32> -> vector<8x128xf32>
    %c0_3 = arith.constant 0 : index
    %c0_4 = arith.constant 0 : index
    %3 = vector.load %arg3[%c0_3, %c0_4] : memref<1x128xf32, #tpu.memory_space<vmem>>, vector<1x128xf32>
    %4 = vector.broadcast %3 : vector<1x128xf32> to vector<8x128xf32>
    %5 = arith.addf %2, %4 : vector<8x128xf32>
    %cst_5 = arith.constant 0.000000e+00 : f32
    %6 = vector.broadcast %cst_5 : f32 to vector<8x128xf32>
    %7 = arith.maximumf %5, %6 : vector<8x128xf32>
    %c0_6 = arith.constant 0 : index
    %c0_7 = arith.constant 0 : index
    %8 = vector.load %arg4[%c0_6, %c0_7] : memref<128x128xf32, #tpu.memory_space<vmem>>, vector<128x128xf32>
    %cst_8 = arith.constant dense<0.000000e+00> : vector<8x128xf32>
    %9 = tpu.matmul %7, %8, %cst_8 {dimension_numbers = #tpu.dot_dimension_numbers<[1], [0], [0], [1], [0, 0, 1, 1], [], []>} : vector<8x128xf32>, vector<128x128xf32>, vector<8x128xf32> -> vector<8x128xf32>
    %c0_9 = arith.constant 0 : index
    %c0_10 = arith.constant 0 : index
    %10 = vector.load %arg5[%c0_9, %c0_10] : memref<1x128xf32, #tpu.memory_space<vmem>>, vector<1x128xf32>
    %11 = vector.broadcast %10 : vector<1x128xf32> to vector<8x128xf32>
    %12 = arith.addf %9, %11 : vector<8x128xf32>
    %cst_11 = arith.constant 0.000000e+00 : f32
    %13 = vector.broadcast %cst_11 : f32 to vector<8x128xf32>
    %14 = arith.maximumf %12, %13 : vector<8x128xf32>
    %c0_12 = arith.constant 0 : index
    %c0_13 = arith.constant 0 : index
    %15 = vector.load %arg6[%c0_12, %c0_13] : memref<128x3xf32, #tpu.memory_space<vmem>>, vector<128x3xf32>
    %cst_14 = arith.constant dense<0.000000e+00> : vector<8x3xf32>
    %16 = tpu.matmul %14, %15, %cst_14 {dimension_numbers = #tpu.dot_dimension_numbers<[1], [0], [0], [1], [0, 0, 1, 1], [], []>} : vector<8x128xf32>, vector<128x3xf32>, vector<8x3xf32> -> vector<8x3xf32>
    %c0_15 = arith.constant 0 : index
    %c0_16 = arith.constant 0 : index
    %17 = vector.load %arg7[%c0_15, %c0_16] : memref<1x3xf32, #tpu.memory_space<vmem>>, vector<1x3xf32>
    %18 = vector.broadcast %17 : vector<1x3xf32> to vector<8x3xf32>
    %19 = arith.addf %16, %18 : vector<8x3xf32>
    %c0_17 = arith.constant 0 : index
    %c0_18 = arith.constant 0 : index
    %20 = vector.load %arg8[%c0_17, %c0_18] : memref<8x3xf32, #tpu.memory_space<vmem>>, vector<8x3xf32>
    tpu.vector_store %arg8[%c0_17, %c0_18], %19 {strides = array<i32>} : memref<8x3xf32, #tpu.memory_space<vmem>>, vector<8x3xf32>,
    return
  }
  func.func @transform_0(%arg0: i32) -> (i32, i32) {
    %c0_i32 = arith.constant 0 : i32
    %c0_i32_0 = arith.constant 0 : i32
    return %arg0, %c0_i32 : i32, i32
  }
  func.func @transform_1(%arg0: i32) -> (i32, i32) {
    %c0_i32 = arith.constant 0 : i32
    %c0_i32_0 = arith.constant 0 : i32
    %c0_i32_1 = arith.constant 0 : i32
    return %c0_i32, %c0_i32_0 : i32, i32
  }
  func.func @transform_2(%arg0: i32) -> (i32, i32) {
    %c0_i32 = arith.constant 0 : i32
    %c0_i32_0 = arith.constant 0 : i32
    %c0_i32_1 = arith.constant 0 : i32
    return %c0_i32, %c0_i32_0 : i32, i32
  }
  func.func @transform_3(%arg0: i32) -> (i32, i32) {
    %c0_i32 = arith.constant 0 : i32
    %c0_i32_0 = arith.constant 0 : i32
    %c0_i32_1 = arith.constant 0 : i32
    return %c0_i32, %c0_i32_0 : i32, i32
  }
  func.func @transform_4(%arg0: i32) -> (i32, i32) {
    %c0_i32 = arith.constant 0 : i32
    %c0_i32_0 = arith.constant 0 : i32
    %c0_i32_1 = arith.constant 0 : i32
    return %c0_i32, %c0_i32_0 : i32, i32
  }
  func.func @transform_5(%arg0: i32) -> (i32, i32) {
    %c0_i32 = arith.constant 0 : i32
    %c0_i32_0 = arith.constant 0 : i32
    %c0_i32_1 = arith.constant 0 : i32
    return %c0_i32, %c0_i32_0 : i32, i32
  }
  func.func @transform_6(%arg0: i32) -> (i32, i32) {
    %c0_i32 = arith.constant 0 : i32
    %c0_i32_0 = arith.constant 0 : i32
    %c0_i32_1 = arith.constant 0 : i32
    return %c0_i32, %c0_i32_0 : i32, i32
  }
  func.func @transform_7(%arg0: i32) -> (i32, i32) {
    %c0_i32 = arith.constant 0 : i32
    %c0_i32_0 = arith.constant 0 : i32
    return %arg0, %c0_i32 : i32, i32
  }
}

</mosaic_0001>

<llo_original>
// kernel: tpu_custom_call.1
$region0: #{tpu_custom_call.1}
  #allocation0 [shape = 'u32[]', space=smem, size = 0x4, offset = 0x4, fixed_abs, tag = 'smem constant byte address 0x4 - core index']
  #allocation1 [shape = 'u32[72,128]{1,0:T(1,128)}', space=vmem, size = 0x9000, scoped, tag = 'internal scratch']
  %s0 = inlined_call_operand.hbm [shape: f32[8,10], index: 0, kind: input, shape index: {}]
  %s1 = inlined_call_operand.hbm [shape: f32[10,128], index: 1, kind: input, shape index: {}]
  %s2 = inlined_call_operand.vmem [shape: f32[1,128], index: 2, kind: input, shape index: {}]
  %s3 = inlined_call_operand.vmem [shape: f32[128,128], index: 3, kind: input, shape index: {}]
  %s4 = inlined_call_operand.vmem [shape: f32[1,128], index: 4, kind: input, shape index: {}]
  %s5 = inlined_call_operand.vmem [shape: f32[128,3], index: 5, kind: input, shape index: {}]
  %s6 = inlined_call_operand.vmem [shape: f32[1,3], index: 6, kind: input, shape index: {}]
  %s7 = inlined_call_operand.vmem [shape: f32[8,3], index: 7, kind: output, shape index: {}]
  %s8 = sld [smem:[#allocation0]]
  $region46: #{tpu_custom_call.1} parent=0
    _
  %s10 = ssub.s32 1, %s8
  %s11 = scalar_select 0, %s10, %s8
  $region1: #{tpu_custom_call.1} parent=0
    #allocation2 [shape = 'u8[4096]{0}', space=vmem, size = 0x1000, scoped, tag = 'input window, operand 0, single buffered']
    #allocation3 [shape = 's32[1]{0}', space=sflag, size = 0x4, scoped, tag = 'scoped memory for tpu_custom_call.1']
    #allocation4 [shape = 'u8[8192]{0}', space=vmem, size = 0x2000, scoped, tag = 'input window, operand 1, single buffered']
    #allocation5 [shape = 's32[1]{0}', space=sflag, size = 0x4, scoped, tag = 'scoped memory for tpu_custom_call.1']
    %12 = vsyncpa [#allocation3], 0
    %13 = vsyncpa [#allocation5], 0
    // Predicated region
    $region2: #{tpu_custom_call.1} parent=1 // pred_check
      _
    $region3: #{tpu_custom_call.1} parent=1 // pred_check_branch
      %15 = sbr.rel (0) target = $region5
    $region4: #{tpu_custom_call.1} parent=1 // pred_region
      %17 = vsyncadd [#allocation3], 0
      %s19 = sshll.u32 %s0, 4
      %s20 = int_to_ptr.hbm [resolvable:$true] %s19
      %s21 = sshll.u32 [#allocation2], 4
      %s22 = int_to_ptr.vmem [resolvable:$true] %s21
      %24 = dma.hbm_to_vmem [thread:$0]  %s20, 128, %s22, [#allocation3]
    $region5: #{tpu_custom_call.1} parent=1 // pred_fallthru
      _
    // Predicated region
    $region6: #{tpu_custom_call.1} parent=1 // pred_check
      _
    $region7: #{tpu_custom_call.1} parent=1 // pred_check_branch
      %26 = sbr.rel (0) target = $region9
    $region8: #{tpu_custom_call.1} parent=1 // pred_region
      %28 = vsyncadd [#allocation5], 0
      %s29 = sshll.u32 %s1, 4
      %s30 = int_to_ptr.hbm [resolvable:$true] %s29
      %s31 = sshll.u32 [#allocation4], 4
      %s32 = int_to_ptr.vmem [resolvable:$true] %s31
      %37 = dma.hbm_to_vmem [thread:$0]  %s30, 256, %s32, [#allocation5], 128, 128, 8
    $region9: #{tpu_custom_call.1} parent=1 // pred_fallthru
      _
    // Predicated region
    $region10: #{tpu_custom_call.1} parent=1 // pred_check
      _
    $region11: #{tpu_custom_call.1} parent=1 // pred_check_branch
      %39 = sbr.rel (0) target = $region13
    $region12: #{tpu_custom_call.1} parent=1 // pred_region
      _
    $region13: #{tpu_custom_call.1} parent=1 // pred_fallthru
      _
    // Predicated region
    $region14: #{tpu_custom_call.1} parent=1 // pred_check
      _
    $region15: #{tpu_custom_call.1} parent=1 // pred_check_branch
      %41 = sbr.rel (0) target = $region17
    $region16: #{tpu_custom_call.1} parent=1 // pred_region
      _
    $region17: #{tpu_custom_call.1} parent=1 // pred_fallthru
      _
    // Predicated region
    $region18: #{tpu_custom_call.1} parent=1 // pred_check
      _
    $region19: #{tpu_custom_call.1} parent=1 // pred_check_branch
      %43 = sbr.rel (0) target = $region21
    $region20: #{tpu_custom_call.1} parent=1 // pred_region
      _
    $region21: #{tpu_custom_call.1} parent=1 // pred_fallthru
      _
    // Predicated region
    $region22: #{tpu_custom_call.1} parent=1 // pred_check
      _
    $region23: #{tpu_custom_call.1} parent=1 // pred_check_branch
      %45 = sbr.rel (0) target = $region25
    $region24: #{tpu_custom_call.1} parent=1 // pred_region
      _
    $region25: #{tpu_custom_call.1} parent=1 // pred_fallthru
      _
    // Predicated region
    $region26: #{tpu_custom_call.1} parent=1 // pred_check
      _
    $region27: #{tpu_custom_call.1} parent=1 // pred_check_branch
      %47 = sbr.rel (0) target = $region29
    $region28: #{tpu_custom_call.1} parent=1 // pred_region
      _
    $region29: #{tpu_custom_call.1} parent=1 // pred_fallthru
      _
    // Predicated region
    $region30: #{tpu_custom_call.1} parent=1 // pred_check
      _
    $region31: #{tpu_custom_call.1} parent=1 // pred_check_branch
      %49 = sbr.rel (0) target = $region33
    $region32: #{tpu_custom_call.1} parent=1 // pred_region
      %51 = dma.done [#allocation3], 128
    $region33: #{tpu_custom_call.1} parent=1 // pred_fallthru
      _
    // Predicated region
    $region34: #{tpu_custom_call.1} parent=1 // pred_check
      _
    $region35: #{tpu_custom_call.1} parent=1 // pred_check_branch
      %53 = sbr.rel (0) target = $region37
    $region36: #{tpu_custom_call.1} parent=1 // pred_region
      %55 = dma.done [#allocation5], 256
    $region37: #{tpu_custom_call.1} parent=1 // pred_fallthru
      _
    %v56 = vld [vmem:[#allocation2] sm:$0xff]
    %v57 = vld [vmem:[#allocation4] sm:$0xff]
    %v58 = vld [vmem:[#allocation4 + $0x8] sm:$0x3]
    %v59 = vld [vmem:[%s2] sm:$0x1]
    %v61 = vperm.slane %v59, 0
    %vm63 = vcmask 80896
    %v65 = vsel %vm63, %v56, 0
    %vm67 = vcmask 1041408
    %v69 = vsel %vm67, %v58, 0
    %71 = vmatpush.msra.mxu0 0.0
    %72 = vmatpush.msra.mxu0 0.0
    %73 = vmatpush.msra.mxu0 0.0
    %74 = vmatpush.msra.mxu0 0.0
    %75 = vmatpush.msra.mxu0 0.0
    %76 = vmatpush.msra.mxu0 0.0
    %77 = vmatpush.msra.mxu0 0.0
    %78 = vmatpush.msra.mxu0 0.0
    %79 = vmatpush.msra.mxu0 0.0
    %80 = vmatpush.msra.mxu0 0.0
    %81 = vmatpush.msra.mxu0 0.0
    %82 = vmatpush.msra.mxu0 0.0
    %83 = vmatpush.msra.mxu0 0.0
    %84 = vmatpush.msra.mxu0 0.0
    %85 = vmatpush.msra.mxu0 %v69
    %86 = vmatpush.msra.mxu0 %v57
    %87 = vmatmul.f32.gmra.mxu0 %v65
    %v88 = vpop.f32.mrf.mxu0
    %v89 = vadd.f32 %v61, %v88
    %90 = vdwg.mxu0
    %v91 = vmax.f32 %v89, 0.0
    %v92 = vld [vmem:[%s3] sm:$0xff]
    %v93 = vld [vmem:[%s3 + $0x8] sm:$0xff]
    %v94 = vld [vmem:[%s3 + $0x10] sm:$0xff]
    %v95 = vld [vmem:[%s3 + $0x18] sm:$0xff]
    %v96 = vld [vmem:[%s3 + $0x20] sm:$0xff]
    %v97 = vld [vmem:[%s3 + $0x28] sm:$0xff]
    %v98 = vld [vmem:[%s3 + $0x30] sm:$0xff]
    %v99 = vld [vmem:[%s3 + $0x38] sm:$0xff]
    %v100 = vld [vmem:[%s3 + $0x40] sm:$0xff]
    %v101 = vld [vmem:[%s3 + $0x48] sm:$0xff]
    %v102 = vld [vmem:[%s3 + $0x50] sm:$0xff]
    %v103 = vld [vmem:[%s3 + $0x58] sm:$0xff]
    %v104 = vld [vmem:[%s3 + $0x60] sm:$0xff]
    %v105 = vld [vmem:[%s3 + $0x68] sm:$0xff]
    %v106 = vld [vmem:[%s3 + $0x70] sm:$0xff]
    %v107 = vld [vmem:[%s3 + $0x78] sm:$0xff]
    %v108 = vld [vmem:[%s4] sm:$0x1]
    %v110 = vperm.slane %v108, 0
    %112 = vmatpush.msra.mxu0 %v107
    %113 = vmatpush.msra.mxu0 %v106
    %114 = vmatpush.msra.mxu0 %v105
    %115 = vmatpush.msra.mxu0 %v104
    %116 = vmatpush.msra.mxu0 %v103
    %117 = vmatpush.msra.mxu0 %v102
    %118 = vmatpush.msra.mxu0 %v101
    %119 = vmatpush.msra.mxu0 %v100
    %120 = vmatpush.msra.mxu0 %v99
    %121 = vmatpush.msra.mxu0 %v98
    %122 = vmatpush.msra.mxu0 %v97
    %123 = vmatpush.msra.mxu0 %v96
    %124 = vmatpush.msra.mxu0 %v95
    %125 = vmatpush.msra.mxu0 %v94
    %126 = vmatpush.msra.mxu0 %v93
    %127 = vmatpush.msra.mxu0 %v92
    %128 = vmatmul.f32.gmra.mxu0 %v91
    %v129 = vpop.f32.mrf.mxu0
    %v130 = vadd.f32 %v110, %v129
    %131 = vdwg.mxu0
    %v132 = vmax.f32 %v130, 0.0
    %v133 = vld [vmem:[%s5] sm:$0xff]
    %v134 = vld [vmem:[%s5 + $0x8] sm:$0xff]
    %v135 = vld [vmem:[%s5 + $0x10] sm:$0xff]
    %v136 = vld [vmem:[%s5 + $0x18] sm:$0xff]
    %v137 = vld [vmem:[%s5 + $0x20] sm:$0xff]
    %v138 = vld [vmem:[%s5 + $0x28] sm:$0xff]
    %v139 = vld [vmem:[%s5 + $0x30] sm:$0xff]
    %v140 = vld [vmem:[%s5 + $0x38] sm:$0xff]
    %v141 = vld [vmem:[%s5 + $0x40] sm:$0xff]
    %v142 = vld [vmem:[%s5 + $0x48] sm:$0xff]
    %v143 = vld [vmem:[%s5 + $0x50] sm:$0xff]
    %v144 = vld [vmem:[%s5 + $0x58] sm:$0xff]
    %v145 = vld [vmem:[%s5 + $0x60] sm:$0xff]
    %v146 = vld [vmem:[%s5 + $0x68] sm:$0xff]
    %v147 = vld [vmem:[%s5 + $0x70] sm:$0xff]
    %v148 = vld [vmem:[%s5 + $0x78] sm:$0xff]
    %v149 = vld [vmem:[%s6] sm:$0x1]
    %v151 = vperm.slane %v149, 0
    %153 = vmatpush.msra.mxu0 %v148
    %154 = vmatpush.msra.mxu0 %v147
    %155 = vmatpush.msra.mxu0 %v146
    %156 = vmatpush.msra.mxu0 %v145
    %157 = vmatpush.msra.mxu0 %v144
    %158 = vmatpush.msra.mxu0 %v143
    %159 = vmatpush.msra.mxu0 %v142
    %160 = vmatpush.msra.mxu0 %v141
    %161 = vmatpush.msra.mxu0 %v140
    %162 = vmatpush.msra.mxu0 %v139
    %163 = vmatpush.msra.mxu0 %v138
    %164 = vmatpush.msra.mxu0 %v137
    %165 = vmatpush.msra.mxu0 %v136
    %166 = vmatpush.msra.mxu0 %v135
    %167 = vmatpush.msra.mxu0 %v134
    %168 = vmatpush.msra.mxu0 %v133
    %169 = vmatmul.f32.gmra.mxu0 %v132
    %v170 = vpop.f32.mrf.mxu0
    %v171 = vadd.f32 %v151, %v170
    %172 = vdwg.mxu0
    %vm173 = vcmask 23552
    %174 = vst.msk [vmem:[%s7] sm:$0xff] %vm173, %v171
    // Predicated region
    $region38: #{tpu_custom_call.1} parent=1 // pred_check
      _
    $region39: #{tpu_custom_call.1} parent=1 // pred_check_branch
      %176 = sbr.rel (0) target = $region41
    $region40: #{tpu_custom_call.1} parent=1 // pred_region
      _
    $region41: #{tpu_custom_call.1} parent=1 // pred_fallthru
      _
    // Predicated region
    $region42: #{tpu_custom_call.1} parent=1 // pred_check
      _
    $region43: #{tpu_custom_call.1} parent=1 // pred_check_branch
      %178 = sbr.rel (0) target = $region45
    $region44: #{tpu_custom_call.1} parent=1 // pred_region
      _
    $region45: #{tpu_custom_call.1} parent=1 // pred_fallthru
      _
    %179 = vsyncpa [#allocation3], 1
    %180 = vsyncpa [#allocation5], 1

</llo_original>
